<compile_context>
chip_gen: v6e
topology: v6e:2x2x1
jax: 0.10.0
libtpu: 0.0.40
codegen_flags: <defaults>
</compile_context>

<pallas_src>
import math

import jax
import jax.numpy as jnp
from jax.experimental import pallas as pl
from jax.experimental.pallas import tpu as pltpu

_SQRT2 = math.sqrt(2.0)
_BN_EPS = 1e-5
_VMEM_LIMIT = 64 * 1024 * 1024  # conservative raise over the 32 MiB default


def _round_up(x, m):
    return ((x + m - 1) // m) * m


def _gelu(x):
    # Exact (erf-based) GELU, matching PyTorch nn.GELU() default.
    # TODO(synk): tanh-approx GELU would route through the EUP slot (cheaper on
    # v6e/v7x) but deviates slightly from PyTorch's exact-GELU numerics.
    return 0.5 * x * (1.0 + jax.lax.erf(x / _SQRT2))


# ----------------------------------------------------------------------------
# Kernel 1: fused  (X @ W + b) -> GELU -> BN affine.
# bf16 MXU matmul with f32 accumulation; used for the patch-embedding conv
# (as a patch matmul) and the 1x1 pointwise conv of every mixer block.
# ----------------------------------------------------------------------------
def _matmul_gelu_affine_kernel(x_ref, w_ref, b_ref, scale_ref, shift_ref, o_ref):
    y = jnp.dot(x_ref[...], w_ref[...], preferred_element_type=jnp.float32)
    y = _gelu(y + b_ref[...])
    o_ref[...] = (y * scale_ref[...] + shift_ref[...]).astype(o_ref.dtype)


def matmul_gelu_affine(x, w, b, scale, shift, *, block_m=512):
    M, K = x.shape
    _, N = w.shape
    # bf16 operands for the MXU (accumulate f32); halves x/w HBM->VMEM bytes.
    x = x.astype(jnp.bfloat16)
    w = w.astype(jnp.bfloat16)
    bm = M if M <= block_m else block_m
    return pl.pallas_call(
        _matmul_gelu_affine_kernel,
        out_shape=jax.ShapeDtypeStruct((M, N), jnp.float32),
        grid=(pl.cdiv(M, bm),),
        in_specs=[
            pl.BlockSpec((bm, K), lambda i: (i, 0)),
            pl.BlockSpec((K, N), lambda i: (0, 0)),
            pl.BlockSpec((1, N), lambda i: (0, 0)),
            pl.BlockSpec((1, N), lambda i: (0, 0)),
            pl.BlockSpec((1, N), lambda i: (0, 0)),
        ],
        out_specs=pl.BlockSpec((bm, N), lambda i: (i, 0)),
        compiler_params=pltpu.CompilerParams(
            dimension_semantics=("parallel",),
            vmem_limit_bytes=_VMEM_LIMIT,
        ),
    )(x, w, b.reshape(1, N), scale.reshape(1, N), shift.reshape(1, N))


# ----------------------------------------------------------------------------
# Kernel 2: fused depthwise conv ('same') -> GELU -> BN affine -> +x (Residual).
# Grid is (batch, channel tiles).  The zero-padding halo is built in a VMEM
# scratch inside the kernel (no jnp.pad round trip through HBM and no second
# copy of the feature map), and the residual is taken from the same input tile.
# ----------------------------------------------------------------------------
def _dw_mixer_kernel(x_ref, w_ref, b_ref, scale_ref, shift_ref, o_ref, xpad_ref):
    _, H, W, _ = x_ref.shape
    k = w_ref.shape[0]
    pad = k // 2

    x = x_ref[...]                                        # (1, H, W, Cb), f32
    # Build the zero-padded tile in VMEM (halo + interior).
    xpad_ref[...] = jnp.zeros_like(xpad_ref)
    xpad_ref[:, pad:pad + H, pad:pad + W, :] = x

    w = w_ref[...]                                        # (k, k, Cb)
    acc = jnp.zeros_like(x, dtype=jnp.float32)
    # TODO(synk): for large k (e.g. 9) consider row-strip tiling and/or
    # pltpu.roll-based shifts to bound vreg live ranges and keep the shifted
    # reads off the vld/VALU path.
    for kh in range(k):                                   # static small unroll
        for kw in range(k):
            acc = acc + xpad_ref[:, kh:kh + H, kw:kw + W, :] * w[kh, kw]
    y = _gelu(acc + b_ref[...])
    y = y * scale_ref[...] + shift_ref[...]
    o_ref[...] = (y + x).astype(o_ref.dtype)


def _pick_block_c(C, max_block=512):
    if C <= 128:
        return C                                          # full-dim block
    for bc in (512, 384, 256, 128):
        if bc <= max_block and C % bc == 0:
            return bc
    return C                                              # fallback: full C


def depthwise_mixer_block(x, w, b, scale, shift):
    # x: (N, H, W, C) ; w: (k, k, C) depthwise filters (odd k -> 'same')
    N, H, W, C = x.shape
    k = w.shape[0]
    pad = k // 2
    bc = _pick_block_c(C)
    return pl.pallas_call(
        _dw_mixer_kernel,
        out_shape=jax.ShapeDtypeStruct((N, H, W, C), jnp.float32),
        grid=(N, C // bc),
        in_specs=[
            pl.BlockSpec((1, H, W, bc), lambda n, c: (n, 0, 0, c)),
            pl.BlockSpec((k, k, bc), lambda n, c: (0, 0, c)),
            pl.BlockSpec((1, bc), lambda n, c: (0, c)),
            pl.BlockSpec((1, bc), lambda n, c: (0, c)),
            pl.BlockSpec((1, bc), lambda n, c: (0, c)),
        ],
        out_specs=pl.BlockSpec((1, H, W, bc), lambda n, c: (n, 0, 0, c)),
        scratch_shapes=[
            pltpu.VMEM((1, H + 2 * pad, W + 2 * pad, bc), jnp.float32)
        ],
        compiler_params=pltpu.CompilerParams(
            dimension_semantics=("parallel", "parallel"),
            vmem_limit_bytes=_VMEM_LIMIT,
        ),
    )(x, w, b.reshape(1, C), scale.reshape(1, C), shift.reshape(1, C))


# ----------------------------------------------------------------------------
# Kernel 3: global average pool + final Linear head (batch-tiled).
# ----------------------------------------------------------------------------
def _pool_linear_kernel(x_ref, w_ref, b_ref, o_ref):
    pooled = jnp.mean(x_ref[...], axis=1)                 # (bn, C)
    y = jnp.dot(pooled, w_ref[...], preferred_element_type=jnp.float32)
    o_ref[...] = (y + b_ref[...]).astype(o_ref.dtype)


def pool_linear(x, w, b, *, block_n=8):
    # x: (N, H*W, C); w: (C, n_classes_padded)
    N, HW, C = x.shape
    ncls = w.shape[1]
    bn = N if N <= block_n else block_n
    return pl.pallas_call(
        _pool_linear_kernel,
        out_shape=jax.ShapeDtypeStruct((N, ncls), jnp.float32),
        grid=(pl.cdiv(N, bn),),
        in_specs=[
            pl.BlockSpec((bn, HW, C), lambda i: (i, 0, 0)),
            pl.BlockSpec((C, ncls), lambda i: (0, 0)),
            pl.BlockSpec((1, ncls), lambda i: (0, 0)),
        ],
        out_specs=pl.BlockSpec((bn, ncls), lambda i: (i, 0)),
        compiler_params=pltpu.CompilerParams(
            dimension_semantics=("parallel",),
            vmem_limit_bytes=_VMEM_LIMIT,
        ),
    )(x, w, b.reshape(1, ncls))


# ----------------------------------------------------------------------------
# Full ConvMixer forward (glue reshapes in plain JAX, hot paths in Pallas).
# ----------------------------------------------------------------------------
def convmixer_forward(x_nchw, params):
    N, Cin, H, W = x_nchw.shape
    P = params["patch_size"]
    dim = params["dim"]
    Hp, Wp = H // P, W // P

    # Patchify (== Conv2d(3, dim, kernel=P, stride=P) with (c, ph, pw) flatten).
    patches = x_nchw.reshape(N, Cin, Hp, P, Wp, P)
    patches = patches.transpose(0, 2, 4, 1, 3, 5).reshape(N * Hp * Wp, Cin * P * P)

    # Pad the contraction dim to a lane-dense multiple of 128 (zeros are exact).
    K = Cin * P * P
    K_pad = _round_up(K, 128)
    pe_w = params["pe_w"]
    if K_pad != K:
        patches = jnp.pad(patches, ((0, 0), (0, K_pad - K)))
        pe_w = jnp.pad(pe_w, ((0, K_pad - K), (0, 0)))

    x = matmul_gelu_affine(patches, pe_w, params["pe_b"],
                           params["pe_bn_scale"], params["pe_bn_shift"])
    x = x.reshape(N, Hp, Wp, dim)

    for blk in params["blocks"]:
        # Residual depthwise spatial mixing.
        x = depthwise_mixer_block(x, blk["dw_w"], blk["dw_b"],
                                  blk["bn1_scale"], blk["bn1_shift"])
        # Pointwise (1x1 conv) channel mixing.
        xf = matmul_gelu_affine(x.reshape(N * Hp * Wp, dim), blk["pw_w"],
                                blk["pw_b"], blk["bn2_scale"], blk["bn2_shift"])
        x = xf.reshape(N, Hp, Wp, dim)

    # Pad n_classes to 128 for a lane-dense head output store; slice back after.
    ncls = params["head_w"].shape[1]
    ncls_pad = _round_up(ncls, 128)
    head_w = jnp.pad(params["head_w"], ((0, 0), (0, ncls_pad - ncls)))
    head_b = jnp.pad(params["head_b"], ((0, ncls_pad - ncls),))
    logits = pool_linear(x.reshape(N, Hp * Wp, dim), head_w, head_b)
    return logits[:, :ncls]


# ----------------------------------------------------------------------------
# Deterministic parameter init (shapes dictated by the PyTorch module).
# ----------------------------------------------------------------------------
def _bn_fold(gamma, beta, mean, var, eps=_BN_EPS):
    scale = gamma / jnp.sqrt(var + eps)
    shift = beta - mean * scale
    return scale, shift


def init_params(key, *, dim, depth, kernel_size, patch_size, n_classes, in_ch=3):
    keys = iter(jax.random.split(key, 6 + 8 * depth))

    def nrm(shape, std=0.1):
        return std * jax.random.normal(next(keys), shape, jnp.float32)

    params = {"dim": dim, "patch_size": patch_size}
    K = in_ch * patch_size * patch_size
    params["pe_w"] = nrm((K, dim))                 # Conv2d(3, dim, P, stride=P) as matmul
    params["pe_b"] = nrm((dim,))
    g, b = 1.0 + nrm((dim,)), nrm((dim,))
    params["pe_bn_scale"], params["pe_bn_shift"] = _bn_fold(g, b, jnp.zeros(dim), jnp.ones(dim))

    blocks = []
    for _ in range(depth):
        blk = {}
        blk["dw_w"] = nrm((kernel_size, kernel_size, dim))   # depthwise filters
        blk["dw_b"] = nrm((dim,))
        g, b = 1.0 + nrm((dim,)), nrm((dim,))
        blk["bn1_scale"], blk["bn1_shift"] = _bn_fold(g, b, jnp.zeros(dim), jnp.ones(dim))
        blk["pw_w"] = nrm((dim, dim))                        # 1x1 conv as matmul
        blk["pw_b"] = nrm((dim,))
        g, b = 1.0 + nrm((dim,)), nrm((dim,))
        blk["bn2_scale"], blk["bn2_shift"] = _bn_fold(g, b, jnp.zeros(dim), jnp.ones(dim))
        blocks.append(blk)
    params["blocks"] = blocks

    params["head_w"] = nrm((dim, n_classes))
    params["head_b"] = nrm((n_classes,))
    return params


# ----------------------------------------------------------------------------
# Pure-JAX reference (same eval-mode BN folding + same bf16 matmul operands)
# for a tight correctness check.
# ----------------------------------------------------------------------------
def reference_forward(x_nchw, params):
    N, Cin, H, W = x_nchw.shape
    P, dim = params["patch_size"], params["dim"]
    Hp, Wp = H // P, W // P
    patches = x_nchw.reshape(N, Cin, Hp, P, Wp, P).transpose(0, 2, 4, 1, 3, 5)
    patches = patches.reshape(N * Hp * Wp, Cin * P * P)

    def bf16_matmul(a, w):
        return jnp.dot(a.astype(jnp.bfloat16), w.astype(jnp.bfloat16),
                       preferred_element_type=jnp.float32)

    y = _gelu(bf16_matmul(patches, params["pe_w"]) + params["pe_b"])
    x = (y * params["pe_bn_scale"] + params["pe_bn_shift"]).reshape(N, Hp, Wp, dim)
    for blk in params["blocks"]:
        k = blk["dw_w"].shape[0]
        dw = jax.lax.conv_general_dilated(
            x, blk["dw_w"].reshape(k, k, 1, dim),
            window_strides=(1, 1), padding="SAME",
            dimension_numbers=("NHWC", "HWIO", "NHWC"),
            feature_group_count=dim) + blk["dw_b"]
        x = _gelu(dw) * blk["bn1_scale"] + blk["bn1_shift"] + x
        pw = _gelu(bf16_matmul(x.reshape(-1, dim), blk["pw_w"]) + blk["pw_b"])
        x = (pw * blk["bn2_scale"] + blk["bn2_shift"]).reshape(N, Hp, Wp, dim)
    pooled = x.mean(axis=(1, 2))
    return pooled @ params["head_w"] + params["head_b"]


if __name__ == "__main__":
    # Small ConvMixer: dim=128 (lane-dense), depth=2, kernel=3, patch=4, classes=16
    dim, depth, kernel_size, patch_size, n_classes = 128, 2, 3, 4, 16
    key = jax.random.PRNGKey(0)
    kx, kp = jax.random.split(key)
    params = init_params(kp, dim=dim, depth=depth, kernel_size=kernel_size,
                         patch_size=patch_size, n_classes=n_classes)
    x = jax.random.normal(kx, (2, 3, 32, 32), jnp.float32)   # NCHW, like PyTorch

    out = jax.block_until_ready(convmixer_forward(x, params))
    ref = jax.block_until_ready(reference_forward(x, params))

    assert out.shape == (2, n_classes), out.shape
    assert bool(jnp.all(jnp.isfinite(out)))
    max_err = float(jnp.max(jnp.abs(out - ref)))
    assert max_err < 2e-3, f"max abs error vs reference: {max_err}"
    print("KERNEL_OK")
</pallas_src>

<mosaic_0001>
module attributes {stable_mosaic.version = 11 : i64} {
  func.func @_matmul_gelu_affine_kernel(%arg0: i32, %arg1: memref<128x128xbf16, #tpu.memory_space<vmem>>, %arg2: memref<128x128xbf16, #tpu.memory_space<vmem>>, %arg3: memref<1x128xf32, #tpu.memory_space<vmem>>, %arg4: memref<1x128xf32, #tpu.memory_space<vmem>>, %arg5: memref<1x128xf32, #tpu.memory_space<vmem>>, %arg6: memref<128x128xf32, #tpu.memory_space<vmem>>) attributes {dimension_semantics = [#tpu.dimension_semantics<parallel>], iteration_bounds = array<i64: 1>, scalar_prefetch = 0 : i64, scratch_operands = 0 : i64, tpu.core_type = #tpu.core_type<tc>, window_params = [{transform_indices = @transform_0, window_bounds = array<i64: 128, 128>}, {pipeline_mode = #tpu.pipeline_mode<synchronous>, transform_indices = @transform_1, window_bounds = array<i64: 128, 128>}, {pipeline_mode = #tpu.pipeline_mode<synchronous>, transform_indices = @transform_2, window_bounds = array<i64: 1, 128>}, {pipeline_mode = #tpu.pipeline_mode<synchronous>, transform_indices = @transform_3, window_bounds = array<i64: 1, 128>}, {pipeline_mode = #tpu.pipeline_mode<synchronous>, transform_indices = @transform_4, window_bounds = array<i64: 1, 128>}, {transform_indices = @transform_5, window_bounds = array<i64: 128, 128>}]} {
    %c0 = arith.constant 0 : index
    %c0_0 = arith.constant 0 : index
    %0 = vector.load %arg1[%c0, %c0_0] : memref<128x128xbf16, #tpu.memory_space<vmem>>, vector<128x128xbf16>
    %c0_1 = arith.constant 0 : index
    %c0_2 = arith.constant 0 : index
    %1 = vector.load %arg2[%c0_1, %c0_2] : memref<128x128xbf16, #tpu.memory_space<vmem>>, vector<128x128xbf16>
    %cst = arith.constant dense<0.000000e+00> : vector<128x128xf32>
    %2 = tpu.matmul %0, %1, %cst {dimension_numbers = #tpu.dot_dimension_numbers<[1], [0], [0], [1], [0, 0, 1, 1], [], []>} : vector<128x128xbf16>, vector<128x128xbf16>, vector<128x128xf32> -> vector<128x128xf32>
    %c0_3 = arith.constant 0 : index
    %c0_4 = arith.constant 0 : index
    %3 = vector.load %arg3[%c0_3, %c0_4] : memref<1x128xf32, #tpu.memory_space<vmem>>, vector<1x128xf32>
    %4 = vector.broadcast %3 : vector<1x128xf32> to vector<128x128xf32>
    %5 = arith.addf %2, %4 : vector<128x128xf32>
    %cst_5 = arith.constant 5.000000e-01 : f32
    %6 = vector.broadcast %cst_5 : f32 to vector<128x128xf32>
    %7 = arith.mulf %6, %5 : vector<128x128xf32>
    %cst_6 = arith.constant 1.41421354 : f32
    %8 = vector.broadcast %cst_6 : f32 to vector<128x128xf32>
    %9 = arith.divf %5, %8 : vector<128x128xf32>
    %10 = math.erf %9 : vector<128x128xf32>
    %cst_7 = arith.constant 1.000000e+00 : f32
    %11 = vector.broadcast %cst_7 : f32 to vector<128x128xf32>
    %12 = arith.addf %11, %10 : vector<128x128xf32>
    %13 = arith.mulf %7, %12 : vector<128x128xf32>
    %c0_8 = arith.constant 0 : index
    %c0_9 = arith.constant 0 : index
    %14 = vector.load %arg4[%c0_8, %c0_9] : memref<1x128xf32, #tpu.memory_space<vmem>>, vector<1x128xf32>
    %15 = vector.broadcast %14 : vector<1x128xf32> to vector<128x128xf32>
    %16 = arith.mulf %13, %15 : vector<128x128xf32>
    %c0_10 = arith.constant 0 : index
    %c0_11 = arith.constant 0 : index
    %17 = vector.load %arg5[%c0_10, %c0_11] : memref<1x128xf32, #tpu.memory_space<vmem>>, vector<1x128xf32>
    %18 = vector.broadcast %17 : vector<1x128xf32> to vector<128x128xf32>
    %19 = arith.addf %16, %18 : vector<128x128xf32>
    %c0_12 = arith.constant 0 : index
    %c0_13 = arith.constant 0 : index
    %20 = vector.load %arg6[%c0_12, %c0_13] : memref<128x128xf32, #tpu.memory_space<vmem>>, vector<128x128xf32>
    tpu.vector_store %arg6[%c0_12, %c0_13], %19 {strides = array<i32>} : memref<128x128xf32, #tpu.memory_space<vmem>>, vector<128x128xf32>,
    return
  }
  func.func @transform_0(%arg0: i32) -> (i32, i32) {
    %c0_i32 = arith.constant 0 : i32
    %c0_i32_0 = arith.constant 0 : i32
    return %arg0, %c0_i32 : i32, i32
  }
  func.func @transform_1(%arg0: i32) -> (i32, i32) {
    %c0_i32 = arith.constant 0 : i32
    %c0_i32_0 = arith.constant 0 : i32
    %c0_i32_1 = arith.constant 0 : i32
    return %c0_i32, %c0_i32_0 : i32, i32
  }
  func.func @transform_2(%arg0: i32) -> (i32, i32) {
    %c0_i32 = arith.constant 0 : i32
    %c0_i32_0 = arith.constant 0 : i32
    %c0_i32_1 = arith.constant 0 : i32
    return %c0_i32, %c0_i32_0 : i32, i32
  }
  func.func @transform_3(%arg0: i32) -> (i32, i32) {
    %c0_i32 = arith.constant 0 : i32
    %c0_i32_0 = arith.constant 0 : i32
    %c0_i32_1 = arith.constant 0 : i32
    return %c0_i32, %c0_i32_0 : i32, i32
  }
  func.func @transform_4(%arg0: i32) -> (i32, i32) {
    %c0_i32 = arith.constant 0 : i32
    %c0_i32_0 = arith.constant 0 : i32
    %c0_i32_1 = arith.constant 0 : i32
    return %c0_i32, %c0_i32_0 : i32, i32
  }
  func.func @transform_5(%arg0: i32) -> (i32, i32) {
    %c0_i32 = arith.constant 0 : i32
    %c0_i32_0 = arith.constant 0 : i32
    return %arg0, %c0_i32 : i32, i32
  }
}

</mosaic_0001>

<llo_original>
// kernel: tpu_custom_call.1
$region0: #{tpu_custom_call.1}
  #allocation0 [shape = 'u32[]', space=smem, size = 0x4, offset = 0x4, fixed_abs, tag = 'smem constant byte address 0x4 - core index']
  #allocation1 [shape = 'u32[144,128]{1,0:T(1,128)}', space=vmem, size = 0x12000, scoped, tag = 'internal scratch']
  %s0 = inlined_call_operand.hbm [shape: bf16[128,128], index: 0, kind: input, shape index: {}]
  %s1 = inlined_call_operand.hbm [shape: bf16[128,128], index: 1, kind: input, shape index: {}]
  %s2 = inlined_call_operand.vmem [shape: f32[1,128], index: 2, kind: input, shape index: {}]
  %s3 = inlined_call_operand.vmem [shape: f32[1,128], index: 3, kind: input, shape index: {}]
  %s4 = inlined_call_operand.vmem [shape: f32[1,128], index: 4, kind: input, shape index: {}]
  %s5 = inlined_call_operand.hbm [shape: f32[128,128], index: 5, kind: output, shape index: {}]
  %s6 = sld [smem:[#allocation0]]
  $region38: #{tpu_custom_call.1} parent=0
    _
  %s8 = ssub.s32 1, %s6
  %s9 = scalar_select 0, %s8, %s6
  $region1: #{tpu_custom_call.1} parent=0
    #allocation2 [shape = 'u8[32768]{0}', space=vmem, size = 0x8000, scoped, tag = 'input window, operand 0, single buffered']
    #allocation3 [shape = 's32[1]{0}', space=sflag, size = 0x4, scoped, tag = 'scoped memory for tpu_custom_call.1']
    #allocation4 [shape = 's32[1]{0}', space=sflag, size = 0x4, scoped, tag = 'scoped memory for tpu_custom_call.1']
    #allocation5 [shape = 'u8[32768]{0}', space=vmem, size = 0x8000, scoped, tag = 'input window, operand 1, single buffered']
    #allocation6 [shape = 's32[1]{0}', space=sflag, size = 0x4, scoped, tag = 'scoped memory for tpu_custom_call.1']
    #allocation7 [shape = 'u8[65536]{0}', space=vmem, size = 0x10000, scoped, tag = 'output window, operand 0, single buffered']
    %10 = vsyncpa [#allocation3], 0
    %11 = vsyncpa [#allocation6], 0
    %12 = vsyncpa [#allocation4], 0
    // Predicated region
    $region2: #{tpu_custom_call.1} parent=1 // pred_check
      _
    $region3: #{tpu_custom_call.1} parent=1 // pred_check_branch
      %14 = sbr.rel (0) target = $region5
    $region4: #{tpu_custom_call.1} parent=1 // pred_region
      %s16 = ssub.s32 1024, 1024
      %17 = vsyncadd [#allocation3], %s16
      %s18 = sshll.u32 [#allocation2], 4
      %s19 = int_to_ptr.vmem [resolvable:$true] %s18
      %24 = dma.hbm_to_vmem [thread:$0]  %s0, 1024, %s19, [#allocation3], 64, 64, 4
    $region5: #{tpu_custom_call.1} parent=1 // pred_fallthru
      _
    // Predicated region
    $region6: #{tpu_custom_call.1} parent=1 // pred_check
      _
    $region7: #{tpu_custom_call.1} parent=1 // pred_check_branch
      %26 = sbr.rel (0) target = $region9
    $region8: #{tpu_custom_call.1} parent=1 // pred_region
      %s28 = ssub.s32 1024, 1024
      %29 = vsyncadd [#allocation6], %s28
      %s30 = sshll.u32 [#allocation5], 4
      %s31 = int_to_ptr.vmem [resolvable:$true] %s30
      %36 = dma.hbm_to_vmem [thread:$0]  %s1, 1024, %s31, [#allocation6], 64, 64, 4
    $region9: #{tpu_custom_call.1} parent=1 // pred_fallthru
      _
    // Predicated region
    $region10: #{tpu_custom_call.1} parent=1 // pred_check
      _
    $region11: #{tpu_custom_call.1} parent=1 // pred_check_branch
      %38 = sbr.rel (0) target = $region13
    $region12: #{tpu_custom_call.1} parent=1 // pred_region
      _
    $region13: #{tpu_custom_call.1} parent=1 // pred_fallthru
      _
    // Predicated region
    $region14: #{tpu_custom_call.1} parent=1 // pred_check
      _
    $region15: #{tpu_custom_call.1} parent=1 // pred_check_branch
      %40 = sbr.rel (0) target = $region17
    $region16: #{tpu_custom_call.1} parent=1 // pred_region
      _
    $region17: #{tpu_custom_call.1} parent=1 // pred_fallthru
      _
    // Predicated region
    $region18: #{tpu_custom_call.1} parent=1 // pred_check
      _
    $region19: #{tpu_custom_call.1} parent=1 // pred_check_branch
      %42 = sbr.rel (0) target = $region21
    $region20: #{tpu_custom_call.1} parent=1 // pred_region
      _
    $region21: #{tpu_custom_call.1} parent=1 // pred_fallthru
      _
    // Predicated region
    $region22: #{tpu_custom_call.1} parent=1 // pred_check
      _
    $region23: #{tpu_custom_call.1} parent=1 // pred_check_branch
      %44 = sbr.rel (0) target = $region25
    $region24: #{tpu_custom_call.1} parent=1 // pred_region
      %45 = dma.done [#allocation3], 1024
    $region25: #{tpu_custom_call.1} parent=1 // pred_fallthru
      _
    // Predicated region
    $region26: #{tpu_custom_call.1} parent=1 // pred_check
      _
    $region27: #{tpu_custom_call.1} parent=1 // pred_check_branch
      %47 = sbr.rel (0) target = $region29
    $region28: #{tpu_custom_call.1} parent=1 // pred_region
      %48 = dma.done [#allocation6], 1024
    $region29: #{tpu_custom_call.1} parent=1 // pred_fallthru
      _
    %v50 = vld [vmem:[#allocation2] sm:$0xf]
    %v51 = vld [vmem:[#allocation2 + $0x4] sm:$0xf]
    %v52 = vld [vmem:[#allocation2 + $0x8] sm:$0xf]
    %v53 = vld [vmem:[#allocation2 + $0xc] sm:$0xf]
    %v54 = vld [vmem:[#allocation2 + $0x10] sm:$0xf]
    %v55 = vld [vmem:[#allocation2 + $0x14] sm:$0xf]
    %v56 = vld [vmem:[#allocation2 + $0x18] sm:$0xf]
    %v57 = vld [vmem:[#allocation2 + $0x1c] sm:$0xf]
    %v58 = vld [vmem:[#allocation2 + $0x20] sm:$0xf]
    %v59 = vld [vmem:[#allocation2 + $0x24] sm:$0xf]
    %v60 = vld [vmem:[#allocation2 + $0x28] sm:$0xf]
    %v61 = vld [vmem:[#allocation2 + $0x2c] sm:$0xf]
    %v62 = vld [vmem:[#allocation2 + $0x30] sm:$0xf]
    %v63 = vld [vmem:[#allocation2 + $0x34] sm:$0xf]
    %v64 = vld [vmem:[#allocation2 + $0x38] sm:$0xf]
    %v65 = vld [vmem:[#allocation2 + $0x3c] sm:$0xf]
    %v66 = vld [vmem:[#allocation5] sm:$0xf]
    %v67 = vld [vmem:[#allocation5 + $0x4] sm:$0xf]
    %v68 = vld [vmem:[#allocation5 + $0x8] sm:$0xf]
    %v69 = vld [vmem:[#allocation5 + $0xc] sm:$0xf]
    %v70 = vld [vmem:[#allocation5 + $0x10] sm:$0xf]
    %v71 = vld [vmem:[#allocation5 + $0x14] sm:$0xf]
    %v72 = vld [vmem:[#allocation5 + $0x18] sm:$0xf]
    %v73 = vld [vmem:[#allocation5 + $0x1c] sm:$0xf]
    %v74 = vld [vmem:[#allocation5 + $0x20] sm:$0xf]
    %v75 = vld [vmem:[#allocation5 + $0x24] sm:$0xf]
    %v76 = vld [vmem:[#allocation5 + $0x28] sm:$0xf]
    %v77 = vld [vmem:[#allocation5 + $0x2c] sm:$0xf]
    %v78 = vld [vmem:[#allocation5 + $0x30] sm:$0xf]
    %v79 = vld [vmem:[#allocation5 + $0x34] sm:$0xf]
    %v80 = vld [vmem:[#allocation5 + $0x38] sm:$0xf]
    %v81 = vld [vmem:[#allocation5 + $0x3c] sm:$0xf]
    %v82 = vld [vmem:[%s2] sm:$0x1]
    %v84 = vlaneseq
    %v85 = vshrl.u32 %v84, 7
    %v86 = vsub.s32 0, %v85
    %v87 = vrot.slane %v82, %v86
    %v105 = vunpack.c.l.b16 %v50
    %v106 = vunpack.c.l.b16 %v51
    %v107 = vunpack.c.l.b16 %v52
    %v108 = vunpack.c.l.b16 %v53
    %v109 = vunpack.c.l.b16 %v54
    %v110 = vunpack.c.l.b16 %v55
    %v111 = vunpack.c.l.b16 %v56
    %v112 = vunpack.c.l.b16 %v57
    %v113 = vunpack.c.l.b16 %v58
    %v114 = vunpack.c.l.b16 %v59
    %v115 = vunpack.c.l.b16 %v60
    %v116 = vunpack.c.l.b16 %v61
    %v117 = vunpack.c.l.b16 %v62
    %v118 = vunpack.c.l.b16 %v63
    %v119 = vunpack.c.l.b16 %v64
    %v120 = vunpack.c.l.b16 %v65
    %v121 = vpack.c.b16 %v106, %v105
    %v122 = vpack.c.b16 %v108, %v107
    %v123 = vpack.c.b16 %v110, %v109
    %v124 = vpack.c.b16 %v112, %v111
    %v125 = vpack.c.b16 %v114, %v113
    %v126 = vpack.c.b16 %v116, %v115
    %v127 = vpack.c.b16 %v118, %v117
    %v128 = vpack.c.b16 %v120, %v119
    %v153 = vunpack.c.l.b16 %v66
    %v154 = vunpack.c.l.b16 %v67
    %v155 = vunpack.c.l.b16 %v68
    %v156 = vunpack.c.l.b16 %v69
    %v157 = vunpack.c.l.b16 %v70
    %v158 = vunpack.c.l.b16 %v71
    %v159 = vunpack.c.l.b16 %v72
    %v160 = vunpack.c.l.b16 %v73
    %v161 = vunpack.c.l.b16 %v74
    %v162 = vunpack.c.l.b16 %v75
    %v163 = vunpack.c.l.b16 %v76
    %v164 = vunpack.c.l.b16 %v77
    %v165 = vunpack.c.l.b16 %v78
    %v166 = vunpack.c.l.b16 %v79
    %v167 = vunpack.c.l.b16 %v80
    %v168 = vunpack.c.l.b16 %v81
    %v169 = vpack.c.b16 %v154, %v153
    %v170 = vpack.c.b16 %v156, %v155
    %v171 = vpack.c.b16 %v158, %v157
    %v172 = vpack.c.b16 %v160, %v159
    %v173 = vpack.c.b16 %v162, %v161
    %v174 = vpack.c.b16 %v164, %v163
    %v175 = vpack.c.b16 %v166, %v165
    %v176 = vpack.c.b16 %v168, %v167
    %185 = vmatprep.subr.bf16.mxu0 0
    %186 = vmatpush1.bf16.msra.mxu0 %v176
    %187 = vmatprep.subr.bf16.mxu0 0
    %188 = vmatpush1.bf16.msra.mxu0 %v175
    %189 = vmatprep.subr.bf16.mxu0 0
    %190 = vmatpush1.bf16.msra.mxu0 %v174
    %191 = vmatprep.subr.bf16.mxu0 0
    %192 = vmatpush1.bf16.msra.mxu0 %v173
    %193 = vmatprep.subr.bf16.mxu0 0
    %194 = vmatpush1.bf16.msra.mxu0 %v172
    %195 = vmatprep.subr.bf16.mxu0 0
    %196 = vmatpush1.bf16.msra.mxu0 %v171
    %197 = vmatprep.subr.bf16.mxu0 0
    %198 = vmatpush1.bf16.msra.mxu0 %v170
    %199 = vmatprep.subr.bf16.mxu0 0
    %200 = vmatpush1.bf16.msra.mxu0 %v169
    %201 = vmatprep.subr.bf16.mxu0 0
    %202 = vmatpush2.bf16.msra.mxu0 0
    %203 = vmatprep.subr.bf16.mxu0 0
    %204 = vmatpush2.bf16.msra.mxu0 0
    %205 = vmatprep.subr.bf16.mxu0 0
    %206 = vmatpush2.bf16.msra.mxu0 0
    %207 = vmatprep.subr.bf16.mxu0 0
    %208 = vmatpush2.bf16.msra.mxu0 0
    %209 = vmatprep.subr.bf16.mxu0 0
    %210 = vmatpush2.bf16.msra.mxu0 0
    %211 = vmatprep.subr.bf16.mxu0 0
    %212 = vmatpush2.bf16.msra.mxu0 0
    %213 = vmatprep.subr.bf16.mxu0 0
    %214 = vmatpush2.bf16.msra.mxu0 0
    %215 = vmatprep.subr.bf16.mxu0 0
    %216 = vmatpush2.bf16.msra.mxu0 0
    %217 = vmatprep.mubr.bf16.mxu0 0
    %218 = vmatmul.mubr.bf16.gmra.mxu0 %v121
    %v219 = vpop.f32.mrf.mxu0
    %v220 = vadd.f32 %v87, %v219
    %v221 = vpop.f32.mrf.mxu0
    %v222 = vpop.f32.mrf.mxu0
    %v223 = vadd.f32 %v87, %v222
    %v224 = vpop.f32.mrf.mxu0
    %225 = vmatprep.mubr.bf16.mxu0 0
    %226 = vmatmul.mubr.bf16.gmra.mxu0 %v122
    %v227 = vpop.f32.mrf.mxu0
    %v228 = vadd.f32 %v87, %v227
    %v229 = vpop.f32.mrf.mxu0
    %v230 = vpop.f32.mrf.mxu0
    %v231 = vadd.f32 %v87, %v230
    %v232 = vpop.f32.mrf.mxu0
    %233 = vmatprep.mubr.bf16.mxu0 0
    %234 = vmatmul.mubr.bf16.gmra.mxu0 %v123
    %v235 = vpop.f32.mrf.mxu0
    %v236 = vadd.f32 %v87, %v235
    %v237 = vpop.f32.mrf.mxu0
    %v238 = vpop.f32.mrf.mxu0
    %v239 = vadd.f32 %v87, %v238
    %v240 = vpop.f32.mrf.mxu0
    %241 = vmatprep.mubr.bf16.mxu0 0
    %242 = vmatmul.mubr.bf16.gmra.mxu0 %v124
    %v243 = vpop.f32.mrf.mxu0
    %v244 = vadd.f32 %v87, %v243
    %v245 = vpop.f32.mrf.mxu0
    %v246 = vpop.f32.mrf.mxu0
    %v247 = vadd.f32 %v87, %v246
    %v248 = vpop.f32.mrf.mxu0
    %249 = vmatprep.mubr.bf16.mxu0 0
    %250 = vmatmul.mubr.bf16.gmra.mxu0 %v125
    %v251 = vpop.f32.mrf.mxu0
    %v252 = vadd.f32 %v87, %v251
    %v253 = vpop.f32.mrf.mxu0
    %v254 = vpop.f32.mrf.mxu0
    %v255 = vadd.f32 %v87, %v254
    %v256 = vpop.f32.mrf.mxu0
    %257 = vmatprep.mubr.bf16.mxu0 0
    %258 = vmatmul.mubr.bf16.gmra.mxu0 %v126
    %v259 = vpop.f32.mrf.mxu0
    %v260 = vadd.f32 %v87, %v259
    %v261 = vpop.f32.mrf.mxu0
    %v262 = vpop.f32.mrf.mxu0
    %v263 = vadd.f32 %v87, %v262
    %v264 = vpop.f32.mrf.mxu0
    %265 = vmatprep.mubr.bf16.mxu0 0
    %266 = vmatmul.mubr.bf16.gmra.mxu0 %v127
    %v267 = vpop.f32.mrf.mxu0
    %v268 = vadd.f32 %v87, %v267
    %v269 = vpop.f32.mrf.mxu0
    %v270 = vpop.f32.mrf.mxu0
    %v271 = vadd.f32 %v87, %v270
    %v272 = vpop.f32.mrf.mxu0
    %273 = vmatprep.mubr.bf16.mxu0 0
    %274 = vmatmul.mubr.bf16.gmra.mxu0 %v128
    %v275 = vpop.f32.mrf.mxu0
    %v276 = vadd.f32 %v87, %v275
    %v277 = vpop.f32.mrf.mxu0
    %v278 = vpop.f32.mrf.mxu0
    %v279 = vadd.f32 %v87, %v278
    %v280 = vpop.f32.mrf.mxu0
    %281 = vdwg.mxu0
    %v282 = vmul.f32 %v220, 0.5
    %v283 = vmul.f32 %v223, 0.5
    %v284 = vmul.f32 %v228, 0.5
    %v285 = vmul.f32 %v231, 0.5
    %v286 = vmul.f32 %v236, 0.5
    %v287 = vmul.f32 %v239, 0.5
    %v288 = vmul.f32 %v244, 0.5
    %v289 = vmul.f32 %v247, 0.5
    %v290 = vmul.f32 %v252, 0.5
    %v291 = vmul.f32 %v255, 0.5
    %v292 = vmul.f32 %v260, 0.5
    %v293 = vmul.f32 %v263, 0.5
    %v294 = vmul.f32 %v268, 0.5
    %v295 = vmul.f32 %v271, 0.5
    %v296 = vmul.f32 %v276, 0.5
    %v297 = vmul.f32 %v279, 0.5
    %v298 = vrcp.pop 1.4142135
    %v299 = vmul.f32 %v220, %v298
    %v300 = vmul.f32 %v223, %v298
    %v301 = vmul.f32 %v228, %v298
    %v302 = vmul.f32 %v231, %v298
    %v303 = vmul.f32 %v236, %v298
    %v304 = vmul.f32 %v239, %v298
    %v305 = vmul.f32 %v244, %v298
    %v306 = vmul.f32 %v247, %v298
    %v307 = vmul.f32 %v252, %v298
    %v308 = vmul.f32 %v255, %v298
    %v309 = vmul.f32 %v260, %v298
    %v310 = vmul.f32 %v263, %v298
    %v311 = vmul.f32 %v268, %v298
    %v312 = vmul.f32 %v271, %v298
    %v313 = vmul.f32 %v276, %v298
    %v314 = vmul.f32 %v279, %v298
    %v315 = verf.f32.pop %v299
    %v316 = verf.f32.pop %v300
    %v317 = verf.f32.pop %v301
    %v318 = verf.f32.pop %v302
    %v319 = verf.f32.pop %v303
    %v320 = verf.f32.pop %v304
    %v321 = verf.f32.pop %v305
    %v322 = verf.f32.pop %v306
    %v323 = verf.f32.pop %v307
    %v324 = verf.f32.pop %v308
    %v325 = verf.f32.pop %v309
    %v326 = verf.f32.pop %v310
    %v327 = verf.f32.pop %v311
    %v328 = verf.f32.pop %v312
    %v329 = verf.f32.pop %v313
    %v330 = verf.f32.pop %v314
    %v331 = vadd.f32 %v315, 1.0
    %v332 = vadd.f32 %v316, 1.0
    %v333 = vadd.f32 %v317, 1.0
    %v334 = vadd.f32 %v318, 1.0
    %v335 = vadd.f32 %v319, 1.0
    %v336 = vadd.f32 %v320, 1.0
    %v337 = vadd.f32 %v321, 1.0
    %v338 = vadd.f32 %v322, 1.0
    %v339 = vadd.f32 %v323, 1.0
    %v340 = vadd.f32 %v324, 1.0
    %v341 = vadd.f32 %v325, 1.0
    %v342 = vadd.f32 %v326, 1.0
    %v343 = vadd.f32 %v327, 1.0
    %v344 = vadd.f32 %v328, 1.0
    %v345 = vadd.f32 %v329, 1.0
    %v346 = vadd.f32 %v330, 1.0
    %v347 = vmul.f32 %v282, %v331
    %v348 = vmul.f32 %v283, %v332
    %v349 = vmul.f32 %v284, %v333
    %v350 = vmul.f32 %v285, %v334
    %v351 = vmul.f32 %v286, %v335
    %v352 = vmul.f32 %v287, %v336
    %v353 = vmul.f32 %v288, %v337
    %v354 = vmul.f32 %v289, %v338
    %v355 = vmul.f32 %v290, %v339
    %v356 = vmul.f32 %v291, %v340
    %v357 = vmul.f32 %v292, %v341
    %v358 = vmul.f32 %v293, %v342
    %v359 = vmul.f32 %v294, %v343
    %v360 = vmul.f32 %v295, %v344
    %v361 = vmul.f32 %v296, %v345
    %v362 = vmul.f32 %v297, %v346
    %v363 = vld [vmem:[%s3] sm:$0x1]
    %v365 = vlaneseq
    %v366 = vshrl.u32 %v365, 7
    %v367 = vsub.s32 0, %v366
    %v368 = vrot.slane %v363, %v367
    %v370 = vmul.f32 %v347, %v368
    %v371 = vmul.f32 %v348, %v368
    %v372 = vmul.f32 %v349, %v368
    %v373 = vmul.f32 %v350, %v368
    %v374 = vmul.f32 %v351, %v368
    %v375 = vmul.f32 %v352, %v368
    %v376 = vmul.f32 %v353, %v368
    %v377 = vmul.f32 %v354, %v368
    %v378 = vmul.f32 %v355, %v368
    %v379 = vmul.f32 %v356, %v368
    %v380 = vmul.f32 %v357, %v368
    %v381 = vmul.f32 %v358, %v368
    %v382 = vmul.f32 %v359, %v368
    %v383 = vmul.f32 %v360, %v368
    %v384 = vmul.f32 %v361, %v368
    %v385 = vmul.f32 %v362, %v368
    %v386 = vld [vmem:[%s4] sm:$0x1]
    %v388 = vlaneseq
    %v389 = vshrl.u32 %v388, 7
    %v390 = vsub.s32 0, %v389
    %v391 = vrot.slane %v386, %v390
    %v393 = vadd.f32 %v370, %v391
    %v394 = vadd.f32 %v371, %v391
    %v395 = vadd.f32 %v372, %v391
    %v396 = vadd.f32 %v373, %v391
    %v397 = vadd.f32 %v374, %v391
    %v398 = vadd.f32 %v375, %v391
    %v399 = vadd.f32 %v376, %v391
    %v400 = vadd.f32 %v377, %v391
    %v401 = vadd.f32 %v378, %v391
    %v402 = vadd.f32 %v379, %v391
    %v403 = vadd.f32 %v380, %v391
    %v404 = vadd.f32 %v381, %v391
    %v405 = vadd.f32 %v382, %v391
    %v406 = vadd.f32 %v383, %v391
    %v407 = vadd.f32 %v384, %v391
    %v408 = vadd.f32 %v385, %v391
    %409 = vst [vmem:[#allocation7] sm:$0xff] %v393
    %410 = vst [vmem:[#allocation7 + $0x8] sm:$0xff] %v394
    %411 = vst [vmem:[#allocation7 + $0x10] sm:$0xff] %v395
    %412 = vst [vmem:[#allocation7 + $0x18] sm:$0xff] %v396
    %413 = vst [vmem:[#allocation7 + $0x20] sm:$0xff] %v397
    %414 = vst [vmem:[#allocation7 + $0x28] sm:$0xff] %v398
    %415 = vst [vmem:[#allocation7 + $0x30] sm:$0xff] %v399
    %416 = vst [vmem:[#allocation7 + $0x38] sm:$0xff] %v400
    %417 = vst [vmem:[#allocation7 + $0x40] sm:$0xff] %v401
    %418 = vst [vmem:[#allocation7 + $0x48] sm:$0xff] %v402
    %419 = vst [vmem:[#allocation7 + $0x50] sm:$0xff] %v403
    %420 = vst [vmem:[#allocation7 + $0x58] sm:$0xff] %v404
    %421 = vst [vmem:[#allocation7 + $0x60] sm:$0xff] %v405
    %422 = vst [vmem:[#allocation7 + $0x68] sm:$0xff] %v406
    %423 = vst [vmem:[#allocation7 + $0x70] sm:$0xff] %v407
    %424 = vst [vmem:[#allocation7 + $0x78] sm:$0xff] %v408
    // Predicated region
    $region30: #{tpu_custom_call.1} parent=1 // pred_check
      _
    $region31: #{tpu_custom_call.1} parent=1 // pred_check_branch
      %426 = sbr.rel (0) target = $region33
    $region32: #{tpu_custom_call.1} parent=1 // pred_region
      %s428 = ssub.s32 2048, 2048
      %429 = vsyncadd [#allocation4], %s428
      %s430 = sshll.u32 [#allocation7], 4
      %s431 = int_to_ptr.vmem [resolvable:$true] %s430
      %436 = dma.vmem_to_hbm [thread:$0]  %s431, 2048, %s5, [#allocation4], 128, 128, 8
    $region33: #{tpu_custom_call.1} parent=1 // pred_fallthru
      _
    // Predicated region
    $region34: #{tpu_custom_call.1} parent=1 // pred_check
      _
    $region35: #{tpu_custom_call.1} parent=1 // pred_check_branch
      %438 = sbr.rel (0) target = $region37
    $region36: #{tpu_custom_call.1} parent=1 // pred_region
      %439 = dma.done [#allocation4], 2048
    $region37: #{tpu_custom_call.1} parent=1 // pred_fallthru
      _
    %440 = vsyncpa [#allocation3], 1
    %441 = vsyncpa [#allocation6], 1
    %442 = vsyncpa [#allocation4], 1

</llo_original>
